<compile_context>
chip_gen: v7x
topology: tpu7x:2x2x1
jax: 0.10.0
libtpu: 0.0.40
codegen_flags: <defaults>
</compile_context>

<pallas_src>
import math
import functools

import jax
import jax.numpy as jnp
from jax.experimental import pallas as pl
from jax.experimental.pallas import tpu as pltpu

_VMEM_LIMIT = 48 * 1024 * 1024  # scoped-VMEM headroom; well under v7x's 64 MiB physical


def _tile(dim: int, pref: int) -> int:
    """Block size: full dim when small, else the largest power-of-two divisor <= pref."""
    if dim <= pref:
        return dim
    t = pref
    while t > 8 and dim % t != 0:
        t //= 2
    return t if dim % t == 0 else dim


# ---------------------------------------------------------------------------
# Tiled matmul (used for the fused QKV projection and for wo)
# ---------------------------------------------------------------------------

def _matmul_kernel(x_ref, w_ref, o_ref, acc_ref):
    @pl.when(pl.program_id(2) == 0)
    def _():
        acc_ref[...] = jnp.zeros_like(acc_ref)

    acc_ref[...] += jnp.dot(x_ref[...], w_ref[...], preferred_element_type=jnp.float32)

    @pl.when(pl.program_id(2) == pl.num_programs(2) - 1)
    def _():
        o_ref[...] = acc_ref[...].astype(o_ref.dtype)


def linear(x, w):
    """x: (M, K), w: (K, N) stored as torch W^T.  Tiled over (M, N, K)."""
    M, K = x.shape
    K2, N = w.shape
    assert K == K2
    tm, tn, tk = _tile(M, 256), _tile(N, 256), _tile(K, 512)
    return pl.pallas_call(
        _matmul_kernel,
        out_shape=jax.ShapeDtypeStruct((M, N), x.dtype),
        grid=(M // tm, N // tn, K // tk),
        in_specs=[
            pl.BlockSpec((tm, tk), lambda i, j, k: (i, k)),
            pl.BlockSpec((tk, tn), lambda i, j, k: (k, j)),
        ],
        out_specs=pl.BlockSpec((tm, tn), lambda i, j, k: (i, j)),
        scratch_shapes=[pltpu.VMEM((tm, tn), jnp.float32)],
        compiler_params=pltpu.CompilerParams(
            dimension_semantics=("parallel", "parallel", "arbitrary"),
            vmem_limit_bytes=_VMEM_LIMIT),
    )(x, w)


# ---------------------------------------------------------------------------
# RoPE on the combined Q|K slab (de-interleaved head_dim basis)
# ---------------------------------------------------------------------------

def _rope_kernel(x_ref, c_ref, s_ref, o_ref):
    x = x_ref[...]                      # (tm, H, hd), per head: [re_0.. | im_0..]
    c = c_ref[...][:, None, :]          # (tm, 1, hd)   broadcast over heads
    s = s_ref[...][:, None, :]          # sign already folded: [-sin | +sin]
    half = x.shape[-1] // 2
    # swap the two halves of each head; shift == size/2 so direction is irrelevant
    x_sw = pltpu.roll(x, shift=half, axis=2)
    o_ref[...] = (x * c + x_sw * s).astype(o_ref.dtype)


def apply_rope(qk, cos2, sin2):
    """qk: (M, Hq+Hkv, hd); cos2/sin2: (M, hd) pre-expanded [cos|cos] / [-sin|+sin]."""
    M, H, hd = qk.shape
    tm = _tile(M, 512)
    return pl.pallas_call(
        _rope_kernel,
        out_shape=jax.ShapeDtypeStruct((M, H, hd), qk.dtype),
        grid=(M // tm,),
        in_specs=[
            pl.BlockSpec((tm, H, hd), lambda i: (i, 0, 0)),
            pl.BlockSpec((tm, hd), lambda i: (i, 0)),
            pl.BlockSpec((tm, hd), lambda i: (i, 0)),
        ],
        out_specs=pl.BlockSpec((tm, H, hd), lambda i: (i, 0, 0)),
        compiler_params=pltpu.CompilerParams(
            dimension_semantics=("parallel",),
            vmem_limit_bytes=_VMEM_LIMIT),
    )(qk, cos2, sin2)


# ---------------------------------------------------------------------------
# Flash-style GQA attention straight off the cache layout
# ---------------------------------------------------------------------------

def _attn_kernel(q_ref, k_ref, v_ref, o_ref, m_scr, l_scr, acc_scr, *,
                 scale, n_rep, kv_len):
    t = pl.program_id(2)
    n_t = pl.num_programs(2)
    _, _, n_q_heads, hd = q_ref.shape          # (1, tq, Hq, hd)
    _, tk, n_kv_heads, _ = k_ref.shape         # (1, tk, Hkv, hd)

    @pl.when(t == 0)
    def _():
        m_scr[...] = jnp.full(m_scr.shape, -jnp.inf, jnp.float32)
        l_scr[...] = jnp.zeros_like(l_scr)
        acc_scr[...] = jnp.zeros_like(acc_scr)

    # mask for ragged / not-yet-written cache rows in this key tile
    col = t * tk + jax.lax.broadcasted_iota(jnp.int32, (1, tk), 1)
    valid = col < kv_len                                           # (1, tk)

    for g in range(n_kv_heads):
        k_g = k_ref[0, :, g, :]                                    # (tk, hd)
        v_g = v_ref[0, :, g, :]
        for r in range(n_rep):
            h = g * n_rep + r
            q_h = q_ref[0, :, h, :] * scale                        # (tq, hd)
            # contract last dims directly (no k.T relayout)
            s = jax.lax.dot_general(q_h, k_g, (((1,), (1,)), ((), ())),
                                    preferred_element_type=jnp.float32)
            s = jnp.where(valid, s, -1e30)
            m_prev = m_scr[h]                                      # (tq, 1)
            m_new = jnp.maximum(m_prev, jnp.max(s, axis=-1, keepdims=True))
            alpha = jnp.exp(m_prev - m_new)
            p = jnp.exp(s - m_new)
            l_scr[h] = alpha * l_scr[h] + jnp.sum(p, axis=-1, keepdims=True)
            acc_scr[h] = alpha * acc_scr[h] + jnp.dot(
                p, v_g, preferred_element_type=jnp.float32)
            m_scr[h] = m_new

    @pl.when(t == n_t - 1)
    def _():
        for h in range(n_q_heads):
            inv = pl.reciprocal(l_scr[h], approx=True)             # EUP, near-free
            o_ref[0, :, h * hd:(h + 1) * hd] = (acc_scr[h] * inv).astype(o_ref.dtype)


def attention(q, k_cache, v_cache, kv_len, scale, n_rep):
    """q: (B, S, Hq, hd); k/v_cache: (Bmax, Tmax, Hkv, hd) -> (B, S, Hq*hd)."""
    B, S, Hq, hd = q.shape
    Bm, Tm, Hkv, _ = k_cache.shape
    tq = _tile(S, 256)
    tk = min(Tm, 512)
    grid = (B, S // tq, pl.cdiv(kv_len, tk))
    kernel = functools.partial(_attn_kernel, scale=scale, n_rep=n_rep, kv_len=kv_len)
    return pl.pallas_call(
        kernel,
        out_shape=jax.ShapeDtypeStruct((B, S, Hq * hd), q.dtype),
        grid=grid,
        in_specs=[
            pl.BlockSpec((1, tq, Hq, hd), lambda b, qi, t: (b, qi, 0, 0)),
            pl.BlockSpec((1, tk, Hkv, hd), lambda b, qi, t: (b, t, 0, 0)),
            pl.BlockSpec((1, tk, Hkv, hd), lambda b, qi, t: (b, t, 0, 0)),
        ],
        out_specs=pl.BlockSpec((1, tq, Hq * hd), lambda b, qi, t: (b, qi, 0)),
        scratch_shapes=[
            pltpu.VMEM((Hq, tq, 1), jnp.float32),   # running max
            pltpu.VMEM((Hq, tq, 1), jnp.float32),   # running denom
            pltpu.VMEM((Hq, tq, hd), jnp.float32),  # running numerator
        ],
        compiler_params=pltpu.CompilerParams(
            dimension_semantics=("parallel", "parallel", "arbitrary"),
            vmem_limit_bytes=_VMEM_LIMIT),
    )(q, k_cache, v_cache)


# ---------------------------------------------------------------------------
# SelfAttention module (thin JAX glue around the Pallas kernels)
# ---------------------------------------------------------------------------

class SelfAttentionPallas:
    def __init__(self, key, dim, n_heads, n_kv_heads, max_batch_size, max_seq_len,
                 w_std=0.2):
        self.n_kv_heads = n_kv_heads if n_kv_heads is not None else n_heads
        self.n_heads_q = n_heads
        self.n_rep = self.n_heads_q // self.n_kv_heads
        self.head_dim = dim // n_heads
        hd = self.head_dim
        assert hd % 2 == 0

        k1, k2, k3, k4 = jax.random.split(key, 4)
        # Weights stored as (in, out) == torch weight transposed (nn.Linear does x @ W^T).
        self.wq_t = (jax.random.normal(k1, (dim, n_heads * hd)) * w_std).astype(jnp.float32)
        self.wk_t = (jax.random.normal(k2, (dim, self.n_kv_heads * hd)) * w_std).astype(jnp.float32)
        self.wv_t = (jax.random.normal(k3, (dim, self.n_kv_heads * hd)) * w_std).astype(jnp.float32)
        self.wo_t = (jax.random.normal(k4, (n_heads * hd, dim)) * w_std).astype(jnp.float32)

        # De-interleave each head's features (evens then odds) for Q and K so RoPE is a
        # roll-by-hd/2.  Fixed permutation applied identically to Q and K -> scores unchanged.
        deint = jnp.concatenate([jnp.arange(0, hd, 2), jnp.arange(1, hd, 2)])

        def permute_heads(w_t, n_h):
            idx = (jnp.arange(n_h)[:, None] * hd + deint[None, :]).reshape(-1)
            return w_t[:, idx]

        # Fused QKV weight: a single matmul instead of three.
        self.w_qkv_t = jnp.concatenate(
            [permute_heads(self.wq_t, self.n_heads_q),
             permute_heads(self.wk_t, self.n_kv_heads),
             self.wv_t], axis=1)

        # KV cache (stores RoPE'd keys in the de-interleaved head_dim basis).
        self.cache_k = jnp.zeros((max_batch_size, max_seq_len, self.n_kv_heads, hd), jnp.float32)
        self.cache_v = jnp.zeros((max_batch_size, max_seq_len, self.n_kv_heads, hd), jnp.float32)

    def __call__(self, x, start_pos, cos, sin):
        B, S, D = x.shape
        hd = self.head_dim
        Hq, Hkv = self.n_heads_q, self.n_kv_heads
        nq, nk = Hq * hd, Hkv * hd

        # Fused QKV projection (one Pallas matmul).
        qkv = linear(x.reshape(B * S, D), self.w_qkv_t)             # (B*S, nq + 2*nk)

        # RoPE on the combined Q|K slab (V untouched).
        qk = qkv[:, :nq + nk].reshape(B * S, Hq + Hkv, hd)
        cos2 = jnp.tile(jnp.concatenate([cos, cos], axis=-1), (B, 1))   # (B*S, hd)
        sin2 = jnp.tile(jnp.concatenate([-sin, sin], axis=-1), (B, 1))
        qk = apply_rope(qk, cos2, sin2)

        xq = qk[:, :Hq, :].reshape(B, S, Hq, hd)
        xk = qk[:, Hq:, :].reshape(B, S, Hkv, hd)
        xv = qkv[:, nq + nk:].reshape(B, S, Hkv, hd)

        # KV-cache update (matches cache[:B, start_pos:start_pos+S] = xk/xv).
        # TODO(synk): under jit with donated cache buffers, replace with an aliased
        # (input_output_aliases) Pallas writeback of only the S new rows.
        self.cache_k = jax.lax.dynamic_update_slice(self.cache_k, xk, (0, start_pos, 0, 0))
        self.cache_v = jax.lax.dynamic_update_slice(self.cache_v, xv, (0, start_pos, 0, 0))

        # GQA attention directly on the cache layout; kv_len handled by in-kernel masking.
        kv_len = start_pos + S
        out = attention(xq, self.cache_k, self.cache_v, kv_len,
                        1.0 / math.sqrt(hd), self.n_rep)            # (B, S, Hq*hd)

        # Output projection (no transpose needed: attention output is already (B,S,Hq*hd)).
        return linear(out.reshape(B * S, Hq * hd), self.wo_t).reshape(B, S, D)


# ---------------------------------------------------------------------------
# Pure-JAX reference (original torch semantics: interleaved RoPE, repeat_kv, transposes)
# ---------------------------------------------------------------------------

def ref_forward(m, cache_k0, cache_v0, x, start_pos, cos, sin):
    P = jax.lax.Precision.HIGHEST
    B, S, D = x.shape
    hd = m.head_dim
    x2d = x.reshape(B * S, D)
    xq = jnp.dot(x2d, m.wq_t, precision=P).reshape(B, S, m.n_heads_q, hd)
    xk = jnp.dot(x2d, m.wk_t, precision=P).reshape(B, S, m.n_kv_heads, hd)
    xv = jnp.dot(x2d, m.wv_t, precision=P).reshape(B, S, m.n_kv_heads, hd)

    def rope(t):
        tb, ts, th, _ = t.shape
        tp = t.reshape(tb, ts, th, hd // 2, 2)
        e, o = tp[..., 0], tp[..., 1]
        c = cos[None, :, None, :]
        s = sin[None, :, None, :]
        return jnp.stack([e * c - o * s, e * s + o * c], axis=-1).reshape(t.shape)

    xq, xk = rope(xq), rope(xk)
    ck = jax.lax.dynamic_update_slice(cache_k0, xk, (0, start_pos, 0, 0))
    cv = jax.lax.dynamic_update_slice(cache_v0, xv, (0, start_pos, 0, 0))
    keys = jnp.repeat(ck[:B, :start_pos + S], m.n_rep, axis=2)
    values = jnp.repeat(cv[:B, :start_pos + S], m.n_rep, axis=2)
    q = jnp.transpose(xq, (0, 2, 1, 3))
    k = jnp.transpose(keys, (0, 2, 1, 3))
    v = jnp.transpose(values, (0, 2, 1, 3))
    scores = jnp.einsum("bhqd,bhkd->bhqk", q, k, precision=P) / math.sqrt(hd)
    p = jax.nn.softmax(scores.astype(jnp.float32), axis=-1)
    o = jnp.einsum("bhqk,bhkd->bhqd", p, v, precision=P)
    o = jnp.transpose(o, (0, 2, 1, 3)).reshape(B * S, m.n_heads_q * hd)
    return jnp.dot(o, m.wo_t, precision=P).reshape(B, S, D)


# ---------------------------------------------------------------------------
# Main
# ---------------------------------------------------------------------------

if __name__ == "__main__":
    dim = 32
    n_heads = 4
    n_kv_heads = 2
    head_dim = dim // n_heads          # 8
    max_batch_size = 2
    max_seq_len = 16
    B, S = 2, 8
    start_pos = 4

    key = jax.random.PRNGKey(0)
    kx, kw = jax.random.split(key)
    x = jax.random.normal(kx, (B, S, dim), dtype=jnp.float32)

    # RoPE frequencies for positions [start_pos, start_pos + S)
    inv_freq = 1.0 / (10000.0 ** (jnp.arange(0, head_dim, 2, dtype=jnp.float32) / head_dim))
    pos = jnp.arange(start_pos, start_pos + S, dtype=jnp.float32)
    angles = jnp.outer(pos, inv_freq)                  # (S, head_dim//2)
    cos, sin = jnp.cos(angles), jnp.sin(angles)

    model = SelfAttentionPallas(kw, dim, n_heads, n_kv_heads, max_batch_size, max_seq_len)
    cache_k0, cache_v0 = model.cache_k, model.cache_v   # zero caches for the reference

    out = jax.block_until_ready(model(x, start_pos, cos, sin))
    assert out.shape == (B, S, dim)

    ref = ref_forward(model, cache_k0, cache_v0, x, start_pos, cos, sin)
    assert jnp.allclose(out, ref, atol=5e-3, rtol=5e-3), (
        f"mismatch vs reference, max abs err = {float(jnp.max(jnp.abs(out - ref)))}")

    print("KERNEL_OK")
</pallas_src>

<mosaic_0001>
module attributes {stable_mosaic.version = 11 : i64} {
  func.func @_matmul_kernel(%arg0: i32, %arg1: i32, %arg2: i32, %arg3: memref<16x32xf32, #tpu.memory_space<vmem>>, %arg4: memref<32x64xf32, #tpu.memory_space<vmem>>, %arg5: memref<16x64xf32, #tpu.memory_space<vmem>>, %arg6: memref<16x64xf32, #tpu.memory_space<vmem>>) attributes {dimension_semantics = [#tpu.dimension_semantics<parallel>, #tpu.dimension_semantics<parallel>, #tpu.dimension_semantics<arbitrary>], iteration_bounds = array<i64: 1, 1, 1>, scalar_prefetch = 0 : i64, scratch_operands = 1 : i64, tpu.core_type = #tpu.core_type<tc>, window_params = [{transform_indices = @transform_0, window_bounds = array<i64: 16, 32>}, {transform_indices = @transform_1, window_bounds = array<i64: 32, 64>}, {transform_indices = @transform_2, window_bounds = array<i64: 16, 64>}]} {
    %c0_i32 = arith.constant 0 : i32
    %0 = arith.cmpi eq, %arg2, %c0_i32 : i32
    %1 = arith.extui %0 : i1 to i32
    %c0_i32_0 = arith.constant 0 : i32
    %2 = arith.cmpi ne, %1, %c0_i32_0 : i32
    scf.if %2 {
      %cst_10 = arith.constant 0.000000e+00 : f32
      %12 = vector.broadcast %cst_10 : f32 to vector<16x64xf32>
      %c0_11 = arith.constant 0 : index
      %c0_12 = arith.constant 0 : index
      %13 = vector.load %arg6[%c0_11, %c0_12] : memref<16x64xf32, #tpu.memory_space<vmem>>, vector<16x64xf32>
      tpu.vector_store %arg6[%c0_11, %c0_12], %12 {strides = array<i32>} : memref<16x64xf32, #tpu.memory_space<vmem>>, vector<16x64xf32>,
    } else {
    }
    %c0 = arith.constant 0 : index
    %c0_1 = arith.constant 0 : index
    %3 = vector.load %arg6[%c0, %c0_1] : memref<16x64xf32, #tpu.memory_space<vmem>>, vector<16x64xf32>
    %c0_2 = arith.constant 0 : index
    %c0_3 = arith.constant 0 : index
    %4 = vector.load %arg3[%c0_2, %c0_3] : memref<16x32xf32, #tpu.memory_space<vmem>>, vector<16x32xf32>
    %c0_4 = arith.constant 0 : index
    %c0_5 = arith.constant 0 : index
    %5 = vector.load %arg4[%c0_4, %c0_5] : memref<32x64xf32, #tpu.memory_space<vmem>>, vector<32x64xf32>
    %cst = arith.constant dense<0.000000e+00> : vector<16x64xf32>
    %6 = tpu.matmul %4, %5, %cst {dimension_numbers = #tpu.dot_dimension_numbers<[1], [0], [0], [1], [0, 0, 1, 1], [], []>} : vector<16x32xf32>, vector<32x64xf32>, vector<16x64xf32> -> vector<16x64xf32>
    %7 = arith.addf %3, %6 : vector<16x64xf32>
    %c0_6 = arith.constant 0 : index
    %c0_7 = arith.constant 0 : index
    %8 = vector.load %arg6[%c0_6, %c0_7] : memref<16x64xf32, #tpu.memory_space<vmem>>, vector<16x64xf32>
    tpu.vector_store %arg6[%c0_6, %c0_7], %7 {strides = array<i32>} : memref<16x64xf32, #tpu.memory_space<vmem>>, vector<16x64xf32>,
    %c0_i32_8 = arith.constant 0 : i32
    %9 = arith.cmpi eq, %arg2, %c0_i32_8 : i32
    %10 = arith.extui %9 : i1 to i32
    %c0_i32_9 = arith.constant 0 : i32
    %11 = arith.cmpi ne, %10, %c0_i32_9 : i32
    scf.if %11 {
      %c0_10 = arith.constant 0 : index
      %c0_11 = arith.constant 0 : index
      %12 = vector.load %arg6[%c0_10, %c0_11] : memref<16x64xf32, #tpu.memory_space<vmem>>, vector<16x64xf32>
      %c0_12 = arith.constant 0 : index
      %c0_13 = arith.constant 0 : index
      %13 = vector.load %arg5[%c0_12, %c0_13] : memref<16x64xf32, #tpu.memory_space<vmem>>, vector<16x64xf32>
      tpu.vector_store %arg5[%c0_12, %c0_13], %12 {strides = array<i32>} : memref<16x64xf32, #tpu.memory_space<vmem>>, vector<16x64xf32>,
    } else {
    }
    return
  }
  func.func @transform_0(%arg0: i32, %arg1: i32, %arg2: i32) -> (i32, i32) {
    %c0_i32 = arith.constant 0 : i32
    return %arg0, %arg2 : i32, i32
  }
  func.func @transform_1(%arg0: i32, %arg1: i32, %arg2: i32) -> (i32, i32) {
    %c0_i32 = arith.constant 0 : i32
    return %arg2, %arg1 : i32, i32
  }
  func.func @transform_2(%arg0: i32, %arg1: i32, %arg2: i32) -> (i32, i32) {
    %c0_i32 = arith.constant 0 : i32
    return %arg0, %arg1 : i32, i32
  }
}

</mosaic_0001>

<llo_original>
// kernel: tpu_custom_call.1
$region0: #{tpu_custom_call.1}
  #allocation0 [shape = 'u32[]', space=smem, size = 0x4, offset = 0x4, fixed_abs, tag = 'smem constant byte address 0x4 - core index']
  #allocation1 [shape = 'u32[144,128]{1,0:T(1,128)}', space=vmem, size = 0x12000, scoped, tag = 'internal scratch']
  #allocation2 [shape = 'f32[16,64]{1,0:T(8,128)}', space=vmem, size = 0x2000, scoped, tag = 'scratch operand']
  %s0 = inlined_call_operand.hbm [shape: f32[16,32], index: 0, kind: input, shape index: {}]
  %s1 = inlined_call_operand.hbm [shape: f32[32,64], index: 1, kind: input, shape index: {}]
  %s2 = inlined_call_operand.hbm [shape: f32[16,64], index: 2, kind: output, shape index: {}]
  %s3 = sld [smem:[#allocation0]]
  $region34: #{tpu_custom_call.1} parent=0
    _
  %s5 = ssub.s32 1, %s3
  %s6 = scalar_select 0, %s5, %s3
  $region1: #{tpu_custom_call.1} parent=0
    #allocation3 [shape = 'u8[8192]{0}', space=vmem, size = 0x2000, scoped, tag = 'input window, operand 0, single buffered']
    #allocation4 [shape = 's32[1]{0}', space=sflag, size = 0x4, scoped, tag = 'scoped memory for tpu_custom_call.1']
    #allocation5 [shape = 's32[1]{0}', space=sflag, size = 0x4, scoped, tag = 'scoped memory for tpu_custom_call.1']
    #allocation6 [shape = 'u8[16384]{0}', space=vmem, size = 0x4000, scoped, tag = 'input window, operand 1, single buffered']
    #allocation7 [shape = 's32[1]{0}', space=sflag, size = 0x4, scoped, tag = 'scoped memory for tpu_custom_call.1']
    #allocation8 [shape = 'u8[8192]{0}', space=vmem, size = 0x2000, scoped, tag = 'output window, operand 0, single buffered']
    %7 = vsyncpa [#allocation4], 0
    %8 = vsyncpa [#allocation7], 0
    %9 = vsyncpa [#allocation5], 0
    // Predicated region
    $region2: #{tpu_custom_call.1} parent=1 // pred_check
      _
    $region3: #{tpu_custom_call.1} parent=1 // pred_check_branch
      %11 = sbr.rel (0) target = $region5
    $region4: #{tpu_custom_call.1} parent=1 // pred_region
      %s13 = ssub.s32 256, 256
      %14 = vsyncadd [#allocation4], %s13
      %s15 = sshll.u32 [#allocation3], 4
      %s16 = int_to_ptr.vmem [resolvable:$true] %s15
      %21 = dma.hbm_to_vmem [thread:$0]  %s0, 256, %s16, [#allocation4], 128, 128, 8
    $region5: #{tpu_custom_call.1} parent=1 // pred_fallthru
      _
    // Predicated region
    $region6: #{tpu_custom_call.1} parent=1 // pred_check
      _
    $region7: #{tpu_custom_call.1} parent=1 // pred_check_branch
      %23 = sbr.rel (0) target = $region9
    $region8: #{tpu_custom_call.1} parent=1 // pred_region
      %s25 = ssub.s32 512, 512
      %26 = vsyncadd [#allocation7], %s25
      %s27 = sshll.u32 [#allocation6], 4
      %s28 = int_to_ptr.vmem [resolvable:$true] %s27
      %33 = dma.hbm_to_vmem [thread:$0]  %s1, 512, %s28, [#allocation7], 128, 128, 8
    $region9: #{tpu_custom_call.1} parent=1 // pred_fallthru
      _
    // Predicated region
    $region10: #{tpu_custom_call.1} parent=1 // pred_check
      _
    $region11: #{tpu_custom_call.1} parent=1 // pred_check_branch
      %35 = sbr.rel (0) target = $region13
    $region12: #{tpu_custom_call.1} parent=1 // pred_region
      %36 = dma.done [#allocation4], 256
    $region13: #{tpu_custom_call.1} parent=1 // pred_fallthru
      _
    // Predicated region
    $region14: #{tpu_custom_call.1} parent=1 // pred_check
      _
    $region15: #{tpu_custom_call.1} parent=1 // pred_check_branch
      %38 = sbr.rel (0) target = $region17
    $region16: #{tpu_custom_call.1} parent=1 // pred_region
      %39 = dma.done [#allocation7], 512
    $region17: #{tpu_custom_call.1} parent=1 // pred_fallthru
      _
    %p40 = scmp.eq.s32.totalorder 0, 0
    // Predicated region
    $region18: #{tpu_custom_call.1} parent=1 // pred_check
      %p41 = pneg %p40
    $region19: #{tpu_custom_call.1} parent=1 // pred_check_branch
      %43 = sbr.rel (%p41) target = $region21
    $region20: #{tpu_custom_call.1} parent=1 // pred_region
      %vm44 = vcmask 523264
      %45 = vst.msk [vmem:[#allocation2] sm:$0xff] %vm44, 0.0
      %46 = vst.msk [vmem:[#allocation2 + $0x8] sm:$0xff] %vm44, 0.0
    $region21: #{tpu_custom_call.1} parent=1 // pred_fallthru
      _
    %v47 = vld [vmem:[#allocation2] sm:$0xff]
    %v48 = vld [vmem:[#allocation2 + $0x8] sm:$0xff]
    %v49 = vld [vmem:[#allocation3] sm:$0xff]
    %v50 = vld [vmem:[#allocation3 + $0x8] sm:$0xff]
    %v51 = vld [vmem:[#allocation6] sm:$0xff]
    %v52 = vld [vmem:[#allocation6 + $0x8] sm:$0xff]
    %v53 = vld [vmem:[#allocation6 + $0x10] sm:$0xff]
    %v54 = vld [vmem:[#allocation6 + $0x18] sm:$0xff]
    %vm55 = vcmask 261120
    %v57 = vsel %vm55, %v49, 0
    %v60 = vsel %vm55, %v50, 0
    %62 = vmatprep.subr.mxu0 0.0
    %63 = vmatpush1.msra.mxu0 %v51
    %64 = vmatprep.subr.mxu0 0.0
    %65 = vmatpush1.msra.mxu0 %v52
    %66 = vmatprep.subr.mxu0 0.0
    %67 = vmatpush1.msra.mxu0 %v53
    %68 = vmatprep.subr.mxu0 0.0
    %69 = vmatpush1.msra.mxu0 %v54
    %70 = vmatprep.subr.mxu0 0.0
    %71 = vmatpush1.msra.mxu0 0.0
    %72 = vmatprep.subr.mxu0 0.0
    %73 = vmatpush1.msra.mxu0 0.0
    %74 = vmatprep.subr.mxu0 0.0
    %75 = vmatpush1.msra.mxu0 0.0
    %76 = vmatprep.subr.mxu0 0.0
    %77 = vmatpush1.msra.mxu0 0.0
    %78 = vmatprep.subr.mxu0 0.0
    %79 = vmatpush1.msra.mxu0 0.0
    %80 = vmatprep.subr.mxu0 0.0
    %81 = vmatpush1.msra.mxu0 0.0
    %82 = vmatprep.subr.mxu0 0.0
    %83 = vmatpush1.msra.mxu0 0.0
    %84 = vmatprep.subr.mxu0 0.0
    %85 = vmatpush1.msra.mxu0 0.0
    %86 = vmatprep.subr.mxu0 0.0
    %87 = vmatpush1.msra.mxu0 0.0
    %88 = vmatprep.subr.mxu0 0.0
    %89 = vmatpush1.msra.mxu0 0.0
    %90 = vmatprep.subr.mxu0 0.0
    %91 = vmatpush1.msra.mxu0 0.0
    %92 = vmatprep.subr.mxu0 0.0
    %93 = vmatpush1.msra.mxu0 0.0
    %94 = vmatprep.subr.mxu0 0.0
    %95 = vmatpush1.msra.mxu0 0.0
    %96 = vmatprep.subr.mxu0 0.0
    %97 = vmatpush1.msra.mxu0 0.0
    %98 = vmatprep.subr.mxu0 0.0
    %99 = vmatpush1.msra.mxu0 0.0
    %100 = vmatprep.subr.mxu0 0.0
    %101 = vmatpush1.msra.mxu0 0.0
    %102 = vmatprep.subr.mxu0 0.0
    %103 = vmatpush1.msra.mxu0 0.0
    %104 = vmatprep.subr.mxu0 0.0
    %105 = vmatpush1.msra.mxu0 0.0
    %106 = vmatprep.subr.mxu0 0.0
    %107 = vmatpush1.msra.mxu0 0.0
    %108 = vmatprep.subr.mxu0 0.0
    %109 = vmatpush1.msra.mxu0 0.0
    %110 = vmatprep.subr.mxu0 0.0
    %111 = vmatpush1.msra.mxu0 0.0
    %112 = vmatprep.subr.mxu0 0.0
    %113 = vmatpush1.msra.mxu0 0.0
    %114 = vmatprep.subr.mxu0 0.0
    %115 = vmatpush1.msra.mxu0 0.0
    %116 = vmatprep.subr.mxu0 0.0
    %117 = vmatpush1.msra.mxu0 0.0
    %118 = vmatprep.subr.mxu0 0.0
    %119 = vmatpush1.msra.mxu0 0.0
    %120 = vmatprep.subr.mxu0 0.0
    %121 = vmatpush1.msra.mxu0 0.0
    %122 = vmatprep.subr.mxu0 0.0
    %123 = vmatpush1.msra.mxu0 0.0
    %124 = vmatprep.subr.mxu0 0.0
    %125 = vmatpush1.msra.mxu0 0.0
    %126 = vmatprep.mubr.f32.mxu0 0.0
    %127 = vmatmul.mubr.f32.gmra.mrb[0].mxu0 %v57
    %v128 = vpop.f32.mrb[0].mxu0
    %v129 = vadd.f32 0.0, %v128
    %v130 = vpop.f32.mrb[0].mxu0
    %131 = vmatprep.mubr.f32.mxu0 0.0
    %132 = vmatmul.mubr.f32.gmra.mrb[0].mxu0 %v60
    %v133 = vpop.f32.mrb[0].mxu0
    %v134 = vadd.f32 0.0, %v133
    %v135 = vpop.f32.mrb[0].mxu0
    %136 = vdwg.mxu0
    %v137 = vadd.f32 %v47, %v129
    %v138 = vadd.f32 %v48, %v134
    %vm139 = vcmask 523264
    %140 = vst.msk [vmem:[#allocation2] sm:$0xff] %vm139, %v137
    %141 = vst.msk [vmem:[#allocation2 + $0x8] sm:$0xff] %vm139, %v138
    // Predicated region
    $region22: #{tpu_custom_call.1} parent=1 // pred_check
      %p142 = pneg %p40
    $region23: #{tpu_custom_call.1} parent=1 // pred_check_branch
      %144 = sbr.rel (%p142) target = $region25
    $region24: #{tpu_custom_call.1} parent=1 // pred_region
      %v145 = vld [vmem:[#allocation2] sm:$0xff]
      %v146 = vld [vmem:[#allocation2 + $0x8] sm:$0xff]
      %147 = vst.msk [vmem:[#allocation8] sm:$0xff] %vm139, %v145
      %148 = vst.msk [vmem:[#allocation8 + $0x8] sm:$0xff] %vm139, %v146
    $region25: #{tpu_custom_call.1} parent=1 // pred_fallthru
      _
    // Predicated region
    $region26: #{tpu_custom_call.1} parent=1 // pred_check
      _
    $region27: #{tpu_custom_call.1} parent=1 // pred_check_branch
      %150 = sbr.rel (0) target = $region29
    $region28: #{tpu_custom_call.1} parent=1 // pred_region
      %s152 = ssub.s32 256, 256
      %153 = vsyncadd [#allocation5], %s152
      %s154 = sshll.u32 [#allocation8], 4
      %s155 = int_to_ptr.vmem [resolvable:$true] %s154
      %160 = dma.vmem_to_hbm [thread:$0]  %s155, 256, %s2, [#allocation5], 128, 128, 8
    $region29: #{tpu_custom_call.1} parent=1 // pred_fallthru
      _
    // Predicated region
    $region30: #{tpu_custom_call.1} parent=1 // pred_check
      _
    $region31: #{tpu_custom_call.1} parent=1 // pred_check_branch
      %162 = sbr.rel (0) target = $region33
    $region32: #{tpu_custom_call.1} parent=1 // pred_region
      %163 = dma.done [#allocation5], 256
    $region33: #{tpu_custom_call.1} parent=1 // pred_fallthru
      _
    %164 = vsyncpa [#allocation4], 1
    %165 = vsyncpa [#allocation7], 1
    %166 = vsyncpa [#allocation5], 1

</llo_original>
